<compile_context>
chip_gen: v7x
topology: tpu7x:2x2x1
jax: 0.10.0
libtpu: 0.0.40
codegen_flags: <defaults>
</compile_context>

<pallas_src>
import re

import jax
import jax.numpy as jnp
from jax.experimental import pallas as pl
from jax.experimental.pallas import tpu as pltpu


_ACT_FNS = {
    "silu": lambda x: x * jax.nn.sigmoid(x),
    "swish": lambda x: x * jax.nn.sigmoid(x),
    "relu": lambda x: jnp.maximum(x, jnp.zeros((), dtype=x.dtype)),
    "gelu": lambda x: jax.nn.gelu(x, approximate=False),
    "gelu_new": lambda x: jax.nn.gelu(x, approximate=True),
    "gelu_pytorch_tanh": lambda x: jax.nn.gelu(x, approximate=True),
    "sigmoid": jax.nn.sigmoid,
    "tanh": jnp.tanh,
}

_MIB = 1024 * 1024


def _tpu_generation():
    """Best-effort TPU generation (5, 6, 7, ...) from device_kind; None if unknown."""
    try:
        kind = jax.devices()[0].device_kind  # e.g. "TPU v5 lite", "TPU v6e", "TPU v7x"
        m = re.search(r"v(\d+)", kind)
        return int(m.group(1)) if m else None
    except Exception:
        return None


def _make_act_kernel(act_fn: str, compute_dtype):
    fn = _ACT_FNS[act_fn]

    def kernel(x_ref, o_ref):
        x = x_ref[...].astype(compute_dtype)
        o_ref[...] = fn(x).astype(o_ref.dtype)

    return kernel


def _act_ref(x: jax.Array, act_fn: str) -> jax.Array:
    """Plain-JAX (XLA fused) path, f32 compute; numerically matching the f32 kernel path."""
    return _ACT_FNS[act_fn](x.astype(jnp.float32)).astype(x.dtype)


def activation_pallas(
    x: jax.Array,
    act_fn: str = "silu",
    *,
    target_block_bytes: int = 8 * _MIB,   # ~8 MiB of input per grid step
    min_pallas_elems: int = 1 << 20,      # below this, XLA fusion wins
    donate_input: bool = False,           # alias output onto input (caller must donate x)
) -> jax.Array:
    """Elementwise activation via a tiled Pallas kernel. Matches torch ACT2FN[act_fn](x)."""
    if act_fn not in _ACT_FNS:
        raise ValueError(f"unsupported act_fn: {act_fn}")

    orig_shape = x.shape
    n = x.size
    if n == 0:
        return x

    # Widest lane-dense last dim that divides the element count (free reshape, no pad).
    C = None
    for cand in (1024, 512, 256, 128):
        if n % cand == 0:
            C = cand
            break

    # Small tensors or ragged sizes: let XLA fuse it (avoids dispatch + pad/copy overhead).
    if C is None or n < min_pallas_elems:
        return _act_ref(x, act_fn)

    gen = _tpu_generation()

    # Generation-specific VMEM budget for the double-buffered pipeline (2 bufs x (in + out)).
    # v7x has 64 MiB physical VMEM/TC -> stay <= ~48 MiB; v5e/v6e have 128 MiB -> allow 64 MiB.
    if gen is None or gen >= 7:
        vmem_budget = 48 * _MIB
    else:
        vmem_budget = 64 * _MIB
    block_bytes = min(int(target_block_bytes), vmem_budget // 4)
    block_bytes = max(block_bytes, 128 * 1024)

    R = n // C
    itemsize = jnp.dtype(x.dtype).itemsize

    # Native sublane packing: 8 rows per vreg tile for 32-bit, 16 for 16-bit, 32 for 8-bit.
    packing = max(1, 4 // itemsize)
    row_align = 8 * packing

    rows_per_block = (block_bytes // (C * itemsize)) // row_align * row_align
    rows_per_block = max(row_align, rows_per_block)
    if rows_per_block >= R:
        rows_per_block = R  # single full-extent block (always a legal block shape)

    grid = (pl.cdiv(R, rows_per_block),)  # Pallas masks the partial last block.

    # bf16 EUP exists on v6e/v7x: compute natively in bf16 there so the single EUP slot
    # doesn't bind at high HBM bandwidth. Keep f32 compute on v5e / unknown chips.
    if x.dtype == jnp.bfloat16 and gen is not None and gen >= 6:
        compute_dtype = jnp.bfloat16
    else:
        compute_dtype = jnp.float32

    x2 = x.reshape(R, C)  # contiguous flatten -> no data movement
    kernel = _make_act_kernel(act_fn, compute_dtype)

    out2 = pl.pallas_call(
        kernel,
        out_shape=jax.ShapeDtypeStruct((R, C), x.dtype),
        grid=grid,
        in_specs=[pl.BlockSpec((rows_per_block, C), lambda i: (i, 0))],
        out_specs=pl.BlockSpec((rows_per_block, C), lambda i: (i, 0)),
        compiler_params=pltpu.CompilerParams(
            dimension_semantics=("parallel",),
            vmem_limit_bytes=vmem_budget,
        ),
        input_output_aliases=({0: 0} if donate_input else {}),
    )(x2)

    return out2.reshape(orig_shape)


def _check(y, y_ref, tol):
    assert y.shape == y_ref.shape and y.dtype == y_ref.dtype
    assert jnp.allclose(
        y.astype(jnp.float32), y_ref.astype(jnp.float32), atol=tol, rtol=tol
    ), "mismatch vs reference activation"


if __name__ == "__main__":
    key = jax.random.PRNGKey(0)
    k1, k2, k3, k4 = jax.random.split(key, 4)

    # 1) Conv-style NCHW activation input (2*4*16*16 = 2048 elems), forced through Pallas.
    x = jax.random.normal(k1, (2, 4, 16, 16), dtype=jnp.float32)
    y = activation_pallas(x, act_fn="silu", min_pallas_elems=0)
    jax.block_until_ready(y)
    _check(y, x * jax.nn.sigmoid(x), 1e-6)

    # 2) bf16 input, forced through Pallas (native bf16 compute on v6e/v7x, f32 on v5e).
    xb = jax.random.normal(k2, (2, 4, 16, 16), dtype=jnp.bfloat16)
    yb = activation_pallas(xb, act_fn="silu", min_pallas_elems=0)
    jax.block_until_ready(yb)
    _check(yb, _act_ref(xb, "silu"), 2e-2)

    # 3) Partial last grid block (R=24, block rows=16 -> grid=2, last block masked).
    xp = jax.random.normal(k3, (4, 8, 24, 32), dtype=jnp.float32)
    yp = activation_pallas(
        xp, act_fn="silu", min_pallas_elems=0, target_block_bytes=16 * 1024 * 4
    )
    jax.block_until_ready(yp)
    _check(yp, xp * jax.nn.sigmoid(xp), 1e-6)

    # 4) Ragged size (105 elems, not a multiple of 128) -> fused-jnp fallback path.
    xr = jax.random.normal(k4, (3, 5, 7), dtype=jnp.float32)
    yr = activation_pallas(xr, act_fn="silu")
    jax.block_until_ready(yr)
    _check(yr, xr * jax.nn.sigmoid(xr), 1e-6)

    # 5) A couple of other act_fns exercised through the kernel path.
    yg = activation_pallas(x, act_fn="gelu_pytorch_tanh", min_pallas_elems=0)
    jax.block_until_ready(yg)
    _check(yg, jax.nn.gelu(x, approximate=True), 1e-5)
    yrl = activation_pallas(x, act_fn="relu", min_pallas_elems=0)
    jax.block_until_ready(yrl)
    _check(yrl, jnp.maximum(x, 0.0), 0.0)

    print("KERNEL_OK")
</pallas_src>

<mosaic_0001>
module attributes {stable_mosaic.version = 11 : i64} {
  func.func @kernel(%arg0: i32, %arg1: memref<2x1024xf32, #tpu.memory_space<vmem>>, %arg2: memref<2x1024xf32, #tpu.memory_space<vmem>>) attributes {dimension_semantics = [#tpu.dimension_semantics<parallel>], iteration_bounds = array<i64: 1>, scalar_prefetch = 0 : i64, scratch_operands = 0 : i64, tpu.core_type = #tpu.core_type<tc>, window_params = [{transform_indices = @transform_0, window_bounds = array<i64: 2, 1024>}, {transform_indices = @transform_1, window_bounds = array<i64: 2, 1024>}]} {
    %c0 = arith.constant 0 : index
    %c0_0 = arith.constant 0 : index
    %0 = vector.load %arg1[%c0, %c0_0] : memref<2x1024xf32, #tpu.memory_space<vmem>>, vector<2x1024xf32>
    %1 = arith.negf %0 : vector<2x1024xf32>
    %2 = math.exp %1 : vector<2x1024xf32>
    %cst = arith.constant 1.000000e+00 : f32
    %3 = vector.broadcast %cst : f32 to vector<2x1024xf32>
    %4 = arith.addf %3, %2 : vector<2x1024xf32>
    %5 = arith.divf %3, %4 : vector<2x1024xf32>
    %6 = arith.mulf %0, %5 : vector<2x1024xf32>
    %c0_1 = arith.constant 0 : index
    %c0_2 = arith.constant 0 : index
    %7 = vector.load %arg2[%c0_1, %c0_2] : memref<2x1024xf32, #tpu.memory_space<vmem>>, vector<2x1024xf32>
    tpu.vector_store %arg2[%c0_1, %c0_2], %6 {strides = array<i32>} : memref<2x1024xf32, #tpu.memory_space<vmem>>, vector<2x1024xf32>,
    return
  }
  func.func @transform_0(%arg0: i32) -> (i32, i32) {
    %c0_i32 = arith.constant 0 : i32
    %c0_i32_0 = arith.constant 0 : i32
    return %arg0, %c0_i32 : i32, i32
  }
  func.func @transform_1(%arg0: i32) -> (i32, i32) {
    %c0_i32 = arith.constant 0 : i32
    %c0_i32_0 = arith.constant 0 : i32
    return %arg0, %c0_i32 : i32, i32
  }
}

</mosaic_0001>

<llo_original>
// kernel: tpu_custom_call.1
$region0: #{tpu_custom_call.1}
  #allocation0 [shape = 'u32[]', space=smem, size = 0x4, offset = 0x4, fixed_abs, tag = 'smem constant byte address 0x4 - core index']
  #allocation1 [shape = 'u32[144,128]{1,0:T(1,128)}', space=vmem, size = 0x12000, scoped, tag = 'internal scratch']
  %s0 = inlined_call_operand.hbm [shape: f32[2,1024], index: 0, kind: input, shape index: {}]
  %s1 = inlined_call_operand.hbm [shape: f32[2,1024], index: 1, kind: output, shape index: {}]
  %s2 = sld [smem:[#allocation0]]
  $region18: #{tpu_custom_call.1} parent=0
    _
  %s4 = ssub.s32 1, %s2
  %s5 = scalar_select 0, %s4, %s2
  $region1: #{tpu_custom_call.1} parent=0
    #allocation2 [shape = 'u8[8192]{0}', space=vmem, size = 0x2000, scoped, tag = 'input window, operand 0, single buffered']
    #allocation3 [shape = 's32[1]{0}', space=sflag, size = 0x4, scoped, tag = 'scoped memory for tpu_custom_call.1']
    #allocation4 [shape = 's32[1]{0}', space=sflag, size = 0x4, scoped, tag = 'scoped memory for tpu_custom_call.1']
    #allocation5 [shape = 'u8[8192]{0}', space=vmem, size = 0x2000, scoped, tag = 'output window, operand 0, single buffered']
    %6 = vsyncpa [#allocation3], 0
    %7 = vsyncpa [#allocation4], 0
    // Predicated region
    $region2: #{tpu_custom_call.1} parent=1 // pred_check
      _
    $region3: #{tpu_custom_call.1} parent=1 // pred_check_branch
      %9 = sbr.rel (0) target = $region5
    $region4: #{tpu_custom_call.1} parent=1 // pred_region
      %s11 = ssub.s32 256, 256
      %12 = vsyncadd [#allocation3], %s11
      %s14 = sshll.u32 [#allocation2], 4
      %s15 = int_to_ptr.vmem [resolvable:$true] %s14
      %17 = dma.hbm_to_vmem [thread:$0]  %s0, 256, %s15, [#allocation3]
    $region5: #{tpu_custom_call.1} parent=1 // pred_fallthru
      _
    // Predicated region
    $region6: #{tpu_custom_call.1} parent=1 // pred_check
      _
    $region7: #{tpu_custom_call.1} parent=1 // pred_check_branch
      %19 = sbr.rel (0) target = $region9
    $region8: #{tpu_custom_call.1} parent=1 // pred_region
      %20 = dma.done [#allocation3], 256
    $region9: #{tpu_custom_call.1} parent=1 // pred_fallthru
      _
    %v21 = vld [vmem:[#allocation2] sm:$0xff]
    %v22 = vld [vmem:[#allocation2 + $0x8] sm:$0xff]
    %v23 = vxor.u32 %v21, 2147483648
    %v24 = vxor.u32 %v22, 2147483648
    %v25 = vmul.f32 %v23, 1.442695
    %v26 = vpow.pop %v25
    %v27 = vmul.f32 %v24, 1.442695
    %v28 = vpow.pop %v27
    %v29 = vadd.f32 %v26, 1.0
    %v30 = vadd.f32 %v28, 1.0
    %v31 = vrcp.pop %v29
    %v32 = vmul.f32 1.0, %v31
    %v33 = vrcp.pop %v30
    %v34 = vmul.f32 1.0, %v33
    %v35 = vmul.f32 %v21, %v32
    %v36 = vmul.f32 %v22, %v34
    %37 = vst [vmem:[#allocation5] sm:$0xff] %v35
    %38 = vst [vmem:[#allocation5 + $0x8] sm:$0xff] %v36
    // Predicated region
    $region10: #{tpu_custom_call.1} parent=1 // pred_check
      _
    $region11: #{tpu_custom_call.1} parent=1 // pred_check_branch
      %40 = sbr.rel (0) target = $region13
    $region12: #{tpu_custom_call.1} parent=1 // pred_region
      %s42 = ssub.s32 256, 256
      %43 = vsyncadd [#allocation4], %s42
      %s45 = sshll.u32 [#allocation5], 4
      %s46 = int_to_ptr.vmem [resolvable:$true] %s45
      %48 = dma.vmem_to_hbm [thread:$0]  %s46, 256, %s1, [#allocation4]
    $region13: #{tpu_custom_call.1} parent=1 // pred_fallthru
      _
    // Predicated region
    $region14: #{tpu_custom_call.1} parent=1 // pred_check
      _
    $region15: #{tpu_custom_call.1} parent=1 // pred_check_branch
      %50 = sbr.rel (0) target = $region17
    $region16: #{tpu_custom_call.1} parent=1 // pred_region
      %51 = dma.done [#allocation4], 256
    $region17: #{tpu_custom_call.1} parent=1 // pred_fallthru
      _
    %52 = vsyncpa [#allocation3], 1
    %53 = vsyncpa [#allocation4], 1

</llo_original>
